<compile_context>
chip_gen: v7x
topology: tpu7x:2x2x1
jax: 0.10.0
libtpu: 0.0.40
codegen_flags: <defaults>
</compile_context>

<pallas_src>
import jax
import jax.numpy as jnp
from jax.experimental import pallas as pl
from jax.experimental.pallas import tpu as pltpu

INPUT_SIZE = 343
NUM_CLASSES = 3
HIDDEN = (256, 128, 64, 32)
LANE = 128            # lane-dense padding target for layer output widths
NEG_BIAS = -1.0e30    # f32 bias for padded logit lanes -> exp() underflows to 0


def mlp_kernel(x_ref,
               w1_ref, b1_ref,
               w2_ref, b2_ref,
               w3_ref, b3_ref,
               w4_ref, b4_ref,
               w5_ref, b5_ref,
               out_ref):
    """Fused 5-layer MLP + softmax on one (TB, 343) batch tile."""
    wdt = w1_ref.dtype  # MXU operand dtype (bf16 or f32); accumulation is f32.

    def linear(h, w_ref, b_ref):
        # In-kernel cast to the MXU dtype (VPU work, hidden under the MXU slot).
        return jnp.dot(h.astype(wdt), w_ref[...],
                       preferred_element_type=jnp.float32) + b_ref[...]

    # Hidden layers: Linear + ReLU (elementwise work kept in f32 - v5e-safe).
    h = x_ref[...]
    h = jnp.maximum(linear(h, w1_ref, b1_ref), 0.0)
    h = jnp.maximum(linear(h, w2_ref, b2_ref), 0.0)
    h = jnp.maximum(linear(h, w3_ref, b3_ref), 0.0)
    h = jnp.maximum(linear(h, w4_ref, b4_ref), 0.0)

    # Final Linear + Softmax(dim=1).  Padded logit lanes carry ~NEG_BIAS, so
    # their exp() is exactly 0 and they do not perturb the normalizer.
    logits = linear(h, w5_ref, b5_ref)
    m = jnp.max(logits, axis=1, keepdims=True)
    e = jnp.exp(logits - m)
    s = jnp.sum(e, axis=1, keepdims=True)
    out_ref[...] = (e * pl.reciprocal(s, approx=False)).astype(out_ref.dtype)


def init_params(key, input_size=INPUT_SIZE, num_classes=NUM_CLASSES):
    """Deterministic init mimicking PyTorch nn.Linear default (U[-1/sqrt(fan_in), +1/sqrt(fan_in)])."""
    dims = (input_size,) + HIDDEN + (num_classes,)
    params = []
    for i in range(len(dims) - 1):
        fan_in, fan_out = dims[i], dims[i + 1]
        key, kw, kb = jax.random.split(key, 3)
        bound = 1.0 / jnp.sqrt(jnp.float32(fan_in))
        # Stored transposed vs PyTorch: (in, out), so the hot path is h @ W + b.
        w = jax.random.uniform(kw, (fan_in, fan_out), jnp.float32, -bound, bound)
        b = jax.random.uniform(kb, (1, fan_out), jnp.float32, -bound, bound)
        params.append((w, b))
    return params


def _round_up(n, m):
    return ((n + m - 1) // m) * m


def _pack_params(params, mxu_dtype):
    """Zero-pad every layer's output width up to a multiple of 128 lanes.

    Exact in f32: padded activation lanes compute relu(0*w + 0) = 0, and the
    padded logit lanes get a -1e30 f32 bias so softmax gives them probability
    0.  The input width (343) is deliberately left unpadded; padding it in HBM
    would add ~12% read bytes on the dominant x stream.
    """
    dims = [params[0][0].shape[0]] + [w.shape[1] for w, _ in params]
    pdims = [dims[0]] + [_round_up(d, LANE) for d in dims[1:]]
    flat = []
    last = len(params) - 1
    for i, (w, b) in enumerate(params):
        in_p, out_p = pdims[i], pdims[i + 1]
        wp = jnp.zeros((in_p, out_p), jnp.float32)
        wp = wp.at[: w.shape[0], : w.shape[1]].set(w.astype(jnp.float32))
        fill = NEG_BIAS if i == last else 0.0
        bp = jnp.full((1, out_p), fill, jnp.float32)
        bp = bp.at[:, : w.shape[1]].set(b.reshape(1, -1).astype(jnp.float32))
        # Weights in the MXU dtype; biases stay f32 (keeps NEG_BIAS exact and
        # the bias-add / ReLU / softmax path in f32 on every TPU generation).
        flat.extend([wp.astype(mxu_dtype), bp])
    return pdims, flat


def mlp_forward(x, params, *, block_batch=2048, use_bf16=True,
                vmem_limit_bytes=32 * 1024 * 1024):
    """Fused MLP forward over a (batch, 343) input.  Returns f32 (batch, 3) probs."""
    batch, in_dim = x.shape
    num_classes = params[-1][0].shape[1]
    if x.dtype not in (jnp.float32, jnp.bfloat16):
        x = x.astype(jnp.float32)
    # NOTE: x is NOT pre-cast to bf16 here; the kernel casts per-tile on the
    # VPU, avoiding an extra full HBM read+write pass over x.

    mxu_dtype = jnp.bfloat16 if use_bf16 else jnp.float32
    out_dtype = jnp.bfloat16 if use_bf16 else jnp.float32

    pdims, flat = _pack_params(params, mxu_dtype)
    out_pad = pdims[-1]
    weight_bytes = sum(int(a.size) * a.dtype.itemsize for a in flat)

    # --- Batch-tile sizing from an explicit VMEM budget ---------------------
    # x / out streams are double-buffered; intermediates are f32; constant-index
    # weights are tiny but default-double-buffered, so count them twice.
    x_row = in_dim * x.dtype.itemsize
    out_row = out_pad * jnp.dtype(out_dtype).itemsize
    act_row = 4 * sum(pdims[1:]) + jnp.dtype(mxu_dtype).itemsize * in_dim
    per_row = 2 * x_row + 2 * out_row + act_row
    budget = vmem_limit_bytes - 2 * weight_bytes - (2 << 20)  # 2 MiB slack
    tb_cap = max(8, (budget // per_row) // 8 * 8)
    tb_cap = min(tb_cap, _round_up(block_batch, 8))

    # >= 2 tiles whenever the batch allows, so ("parallel",) grid semantics
    # can shard batch tiles across both v7x TensorCores (no-op on v5e/v6e).
    n_tiles = max(pl.cdiv(batch, tb_cap), 2)
    tb = max(8, _round_up(pl.cdiv(batch, n_tiles), 8))

    # Ragged batches: no full-array jnp.pad — use a pl.cdiv grid and let Pallas
    # mask the partial final tile.  Only a tiny batch (< one block of rows,
    # i.e. batch < ~15) ever gets padded, which is negligible.
    rows = max(batch, tb)
    if rows != batch:
        x = jnp.pad(x, ((0, rows - batch), (0, 0)))
    grid = (pl.cdiv(rows, tb),)

    # x streams per batch tile; weights/biases are VMEM-resident (constant maps).
    in_specs = [pl.BlockSpec((tb, in_dim), lambda i: (i, 0))]
    for arr in flat:
        in_specs.append(pl.BlockSpec(arr.shape, lambda i: (0, 0)))
    out_spec = pl.BlockSpec((tb, out_pad), lambda i: (i, 0))

    # Advisory cost estimate for the XLA scheduler.
    flops = 2 * rows * sum(pdims[i] * pdims[i + 1] for i in range(len(pdims) - 1))
    bytes_accessed = rows * x_row + rows * out_row + weight_bytes
    cost = pl.CostEstimate(flops=int(flops),
                           transcendentals=int(rows * out_pad),
                           bytes_accessed=int(bytes_accessed))

    out = pl.pallas_call(
        mlp_kernel,
        out_shape=jax.ShapeDtypeStruct((rows, out_pad), out_dtype),
        grid=grid,
        in_specs=in_specs,
        out_specs=out_spec,
        compiler_params=pltpu.CompilerParams(
            dimension_semantics=("parallel",),
            vmem_limit_bytes=int(vmem_limit_bytes)),
        cost_estimate=cost,
    )(x, *flat)

    # Lane-dense (rows, 128) slab -> the 3 real class probabilities, f32.
    return out[:batch, :num_classes].astype(jnp.float32)


def mlp_reference(x, params):
    h = x
    for i, (w, b) in enumerate(params):
        h = h @ w + b
        if i < len(params) - 1:
            h = jnp.maximum(h, 0.0)
    return jax.nn.softmax(h, axis=1)


if __name__ == "__main__":
    key = jax.random.PRNGKey(0)
    key, kx, kx2 = jax.random.split(key, 3)
    params = init_params(key)

    # Small example consistent with the module: batch=4, 343 features.
    batch = 4
    x = jax.random.normal(kx, (batch, INPUT_SIZE), jnp.float32)
    ref = mlp_reference(x, params)

    # Exact path (f32 MXU operands, f32 output slab) — strict tolerance.
    out_f32 = jax.block_until_ready(mlp_forward(x, params, use_bf16=False))
    assert out_f32.shape == (batch, NUM_CLASSES)
    assert jnp.allclose(out_f32, ref, atol=1e-5, rtol=1e-5)
    assert jnp.allclose(jnp.sum(out_f32, axis=1), jnp.ones((batch,)), atol=1e-5)

    # Default fast path (bf16 MXU operands, bf16 output slab) — looser tolerance.
    out = jax.block_until_ready(mlp_forward(x, params))
    assert out.shape == (batch, NUM_CLASSES)
    assert jnp.allclose(out, ref, atol=5e-2)
    assert jnp.allclose(jnp.sum(out, axis=1), jnp.ones((batch,)), atol=3e-2)

    # Ragged batch / multi-tile grid (exercises >=2 tiles + masked partial tile).
    batch2 = 300
    x2 = jax.random.normal(kx2, (batch2, INPUT_SIZE), jnp.float32)
    ref2 = mlp_reference(x2, params)

    out2_f32 = jax.block_until_ready(
        mlp_forward(x2, params, block_batch=128, use_bf16=False))
    assert out2_f32.shape == (batch2, NUM_CLASSES)
    assert jnp.allclose(out2_f32, ref2, atol=1e-5, rtol=1e-5)
    assert jnp.allclose(jnp.sum(out2_f32, axis=1), jnp.ones((batch2,)), atol=1e-5)

    out2 = jax.block_until_ready(mlp_forward(x2, params, block_batch=128))
    assert out2.shape == (batch2, NUM_CLASSES)
    assert jnp.allclose(out2, ref2, atol=5e-2)
    assert jnp.allclose(jnp.sum(out2, axis=1), jnp.ones((batch2,)), atol=3e-2)

    print("KERNEL_OK")
</pallas_src>

<mosaic_0001>
module attributes {stable_mosaic.version = 11 : i64} {
  func.func @mlp_kernel(%arg0: i32, %arg1: memref<8x343xf32, #tpu.memory_space<vmem>>, %arg2: memref<343x256xf32, #tpu.memory_space<vmem>>, %arg3: memref<1x256xf32, #tpu.memory_space<vmem>>, %arg4: memref<256x128xf32, #tpu.memory_space<vmem>>, %arg5: memref<1x128xf32, #tpu.memory_space<vmem>>, %arg6: memref<128x128xf32, #tpu.memory_space<vmem>>, %arg7: memref<1x128xf32, #tpu.memory_space<vmem>>, %arg8: memref<128x128xf32, #tpu.memory_space<vmem>>, %arg9: memref<1x128xf32, #tpu.memory_space<vmem>>, %arg10: memref<128x128xf32, #tpu.memory_space<vmem>>, %arg11: memref<1x128xf32, #tpu.memory_space<vmem>>, %arg12: memref<8x128xf32, #tpu.memory_space<vmem>>) attributes {dimension_semantics = [#tpu.dimension_semantics<parallel>], iteration_bounds = array<i64: 1>, scalar_prefetch = 0 : i64, scratch_operands = 0 : i64, tpu.core_type = #tpu.core_type<tc>, window_params = [{transform_indices = @transform_0, window_bounds = array<i64: 8, 343>}, {pipeline_mode = #tpu.pipeline_mode<synchronous>, transform_indices = @transform_1, window_bounds = array<i64: 343, 256>}, {pipeline_mode = #tpu.pipeline_mode<synchronous>, transform_indices = @transform_2, window_bounds = array<i64: 1, 256>}, {pipeline_mode = #tpu.pipeline_mode<synchronous>, transform_indices = @transform_3, window_bounds = array<i64: 256, 128>}, {pipeline_mode = #tpu.pipeline_mode<synchronous>, transform_indices = @transform_4, window_bounds = array<i64: 1, 128>}, {pipeline_mode = #tpu.pipeline_mode<synchronous>, transform_indices = @transform_5, window_bounds = array<i64: 128, 128>}, {pipeline_mode = #tpu.pipeline_mode<synchronous>, transform_indices = @transform_6, window_bounds = array<i64: 1, 128>}, {pipeline_mode = #tpu.pipeline_mode<synchronous>, transform_indices = @transform_7, window_bounds = array<i64: 128, 128>}, {pipeline_mode = #tpu.pipeline_mode<synchronous>, transform_indices = @transform_8, window_bounds = array<i64: 1, 128>}, {pipeline_mode = #tpu.pipeline_mode<synchronous>, transform_indices = @transform_9, window_bounds = array<i64: 128, 128>}, {pipeline_mode = #tpu.pipeline_mode<synchronous>, transform_indices = @transform_10, window_bounds = array<i64: 1, 128>}, {transform_indices = @transform_11, window_bounds = array<i64: 8, 128>}]} {
    %c0 = arith.constant 0 : index
    %c0_0 = arith.constant 0 : index
    %0 = vector.load %arg1[%c0, %c0_0] : memref<8x343xf32, #tpu.memory_space<vmem>>, vector<8x343xf32>
    %c0_1 = arith.constant 0 : index
    %c0_2 = arith.constant 0 : index
    %1 = vector.load %arg2[%c0_1, %c0_2] : memref<343x256xf32, #tpu.memory_space<vmem>>, vector<343x256xf32>
    %cst = arith.constant dense<0.000000e+00> : vector<8x256xf32>
    %2 = tpu.matmul %0, %1, %cst {dimension_numbers = #tpu.dot_dimension_numbers<[1], [0], [0], [1], [0, 0, 1, 1], [], []>} : vector<8x343xf32>, vector<343x256xf32>, vector<8x256xf32> -> vector<8x256xf32>
    %c0_3 = arith.constant 0 : index
    %c0_4 = arith.constant 0 : index
    %3 = vector.load %arg3[%c0_3, %c0_4] : memref<1x256xf32, #tpu.memory_space<vmem>>, vector<1x256xf32>
    %4 = vector.broadcast %3 : vector<1x256xf32> to vector<8x256xf32>
    %5 = arith.addf %2, %4 : vector<8x256xf32>
    %cst_5 = arith.constant 0.000000e+00 : f32
    %6 = vector.broadcast %cst_5 : f32 to vector<8x256xf32>
    %7 = arith.maximumf %5, %6 : vector<8x256xf32>
    %c0_6 = arith.constant 0 : index
    %c0_7 = arith.constant 0 : index
    %8 = vector.load %arg4[%c0_6, %c0_7] : memref<256x128xf32, #tpu.memory_space<vmem>>, vector<256x128xf32>
    %cst_8 = arith.constant dense<0.000000e+00> : vector<8x128xf32>
    %9 = tpu.matmul %7, %8, %cst_8 {dimension_numbers = #tpu.dot_dimension_numbers<[1], [0], [0], [1], [0, 0, 1, 1], [], []>} : vector<8x256xf32>, vector<256x128xf32>, vector<8x128xf32> -> vector<8x128xf32>
    %c0_9 = arith.constant 0 : index
    %c0_10 = arith.constant 0 : index
    %10 = vector.load %arg5[%c0_9, %c0_10] : memref<1x128xf32, #tpu.memory_space<vmem>>, vector<1x128xf32>
    %11 = vector.broadcast %10 : vector<1x128xf32> to vector<8x128xf32>
    %12 = arith.addf %9, %11 : vector<8x128xf32>
    %cst_11 = arith.constant 0.000000e+00 : f32
    %13 = vector.broadcast %cst_11 : f32 to vector<8x128xf32>
    %14 = arith.maximumf %12, %13 : vector<8x128xf32>
    %c0_12 = arith.constant 0 : index
    %c0_13 = arith.constant 0 : index
    %15 = vector.load %arg6[%c0_12, %c0_13] : memref<128x128xf32, #tpu.memory_space<vmem>>, vector<128x128xf32>
    %cst_14 = arith.constant dense<0.000000e+00> : vector<8x128xf32>
    %16 = tpu.matmul %14, %15, %cst_14 {dimension_numbers = #tpu.dot_dimension_numbers<[1], [0], [0], [1], [0, 0, 1, 1], [], []>} : vector<8x128xf32>, vector<128x128xf32>, vector<8x128xf32> -> vector<8x128xf32>
    %c0_15 = arith.constant 0 : index
    %c0_16 = arith.constant 0 : index
    %17 = vector.load %arg7[%c0_15, %c0_16] : memref<1x128xf32, #tpu.memory_space<vmem>>, vector<1x128xf32>
    %18 = vector.broadcast %17 : vector<1x128xf32> to vector<8x128xf32>
    %19 = arith.addf %16, %18 : vector<8x128xf32>
    %cst_17 = arith.constant 0.000000e+00 : f32
    %20 = vector.broadcast %cst_17 : f32 to vector<8x128xf32>
    %21 = arith.maximumf %19, %20 : vector<8x128xf32>
    %c0_18 = arith.constant 0 : index
    %c0_19 = arith.constant 0 : index
    %22 = vector.load %arg8[%c0_18, %c0_19] : memref<128x128xf32, #tpu.memory_space<vmem>>, vector<128x128xf32>
    %cst_20 = arith.constant dense<0.000000e+00> : vector<8x128xf32>
    %23 = tpu.matmul %21, %22, %cst_20 {dimension_numbers = #tpu.dot_dimension_numbers<[1], [0], [0], [1], [0, 0, 1, 1], [], []>} : vector<8x128xf32>, vector<128x128xf32>, vector<8x128xf32> -> vector<8x128xf32>
    %c0_21 = arith.constant 0 : index
    %c0_22 = arith.constant 0 : index
    %24 = vector.load %arg9[%c0_21, %c0_22] : memref<1x128xf32, #tpu.memory_space<vmem>>, vector<1x128xf32>
    %25 = vector.broadcast %24 : vector<1x128xf32> to vector<8x128xf32>
    %26 = arith.addf %23, %25 : vector<8x128xf32>
    %cst_23 = arith.constant 0.000000e+00 : f32
    %27 = vector.broadcast %cst_23 : f32 to vector<8x128xf32>
    %28 = arith.maximumf %26, %27 : vector<8x128xf32>
    %c0_24 = arith.constant 0 : index
    %c0_25 = arith.constant 0 : index
    %29 = vector.load %arg10[%c0_24, %c0_25] : memref<128x128xf32, #tpu.memory_space<vmem>>, vector<128x128xf32>
    %cst_26 = arith.constant dense<0.000000e+00> : vector<8x128xf32>
    %30 = tpu.matmul %28, %29, %cst_26 {dimension_numbers = #tpu.dot_dimension_numbers<[1], [0], [0], [1], [0, 0, 1, 1], [], []>} : vector<8x128xf32>, vector<128x128xf32>, vector<8x128xf32> -> vector<8x128xf32>
    %c0_27 = arith.constant 0 : index
    %c0_28 = arith.constant 0 : index
    %31 = vector.load %arg11[%c0_27, %c0_28] : memref<1x128xf32, #tpu.memory_space<vmem>>, vector<1x128xf32>
    %32 = vector.broadcast %31 : vector<1x128xf32> to vector<8x128xf32>
    %33 = arith.addf %30, %32 : vector<8x128xf32>
    %cst_29 = arith.constant dense<0xFF800000> : vector<8xf32>
    %34 = vector.multi_reduction <maximumf>, %33, %cst_29 [1] : vector<8x128xf32> to vector<8xf32>
    %35 = vector.shape_cast %34 : vector<8xf32> to vector<8x1xf32>
    %36 = vector.broadcast %35 : vector<8x1xf32> to vector<8x128xf32>
    %37 = arith.subf %33, %36 : vector<8x128xf32>
    %38 = math.exp %37 : vector<8x128xf32>
    %cst_30 = arith.constant dense<0.000000e+00> : vector<8xf32>
    %39 = vector.multi_reduction <add>, %38, %cst_30 [1] : vector<8x128xf32> to vector<8xf32>
    %40 = vector.shape_cast %39 : vector<8xf32> to vector<8x1xf32>
    %41 = tpu.reciprocal %40 : vector<8x1xf32> -> vector<8x1xf32>
    %42 = vector.broadcast %41 : vector<8x1xf32> to vector<8x128xf32>
    %43 = arith.mulf %38, %42 : vector<8x128xf32>
    %c0_31 = arith.constant 0 : index
    %c0_32 = arith.constant 0 : index
    %44 = vector.load %arg12[%c0_31, %c0_32] : memref<8x128xf32, #tpu.memory_space<vmem>>, vector<8x128xf32>
    tpu.vector_store %arg12[%c0_31, %c0_32], %43 {strides = array<i32>} : memref<8x128xf32, #tpu.memory_space<vmem>>, vector<8x128xf32>,
    return
  }
  func.func @transform_0(%arg0: i32) -> (i32, i32) {
    %c0_i32 = arith.constant 0 : i32
    %c0_i32_0 = arith.constant 0 : i32
    return %arg0, %c0_i32 : i32, i32
  }
  func.func @transform_1(%arg0: i32) -> (i32, i32) {
    %c0_i32 = arith.constant 0 : i32
    %c0_i32_0 = arith.constant 0 : i32
    %c0_i32_1 = arith.constant 0 : i32
    return %c0_i32, %c0_i32_0 : i32, i32
  }
  func.func @transform_2(%arg0: i32) -> (i32, i32) {
    %c0_i32 = arith.constant 0 : i32
    %c0_i32_0 = arith.constant 0 : i32
    %c0_i32_1 = arith.constant 0 : i32
    return %c0_i32, %c0_i32_0 : i32, i32
  }
  func.func @transform_3(%arg0: i32) -> (i32, i32) {
    %c0_i32 = arith.constant 0 : i32
    %c0_i32_0 = arith.constant 0 : i32
    %c0_i32_1 = arith.constant 0 : i32
    return %c0_i32, %c0_i32_0 : i32, i32
  }
  func.func @transform_4(%arg0: i32) -> (i32, i32) {
    %c0_i32 = arith.constant 0 : i32
    %c0_i32_0 = arith.constant 0 : i32
    %c0_i32_1 = arith.constant 0 : i32
    return %c0_i32, %c0_i32_0 : i32, i32
  }
  func.func @transform_5(%arg0: i32) -> (i32, i32) {
    %c0_i32 = arith.constant 0 : i32
    %c0_i32_0 = arith.constant 0 : i32
    %c0_i32_1 = arith.constant 0 : i32
    return %c0_i32, %c0_i32_0 : i32, i32
  }
  func.func @transform_6(%arg0: i32) -> (i32, i32) {
    %c0_i32 = arith.constant 0 : i32
    %c0_i32_0 = arith.constant 0 : i32
    %c0_i32_1 = arith.constant 0 : i32
    return %c0_i32, %c0_i32_0 : i32, i32
  }
  func.func @transform_7(%arg0: i32) -> (i32, i32) {
    %c0_i32 = arith.constant 0 : i32
    %c0_i32_0 = arith.constant 0 : i32
    %c0_i32_1 = arith.constant 0 : i32
    return %c0_i32, %c0_i32_0 : i32, i32
  }
  func.func @transform_8(%arg0: i32) -> (i32, i32) {
    %c0_i32 = arith.constant 0 : i32
    %c0_i32_0 = arith.constant 0 : i32
    %c0_i32_1 = arith.constant 0 : i32
    return %c0_i32, %c0_i32_0 : i32, i32
  }
  func.func @transform_9(%arg0: i32) -> (i32, i32) {
    %c0_i32 = arith.constant 0 : i32
    %c0_i32_0 = arith.constant 0 : i32
    %c0_i32_1 = arith.constant 0 : i32
    return %c0_i32, %c0_i32_0 : i32, i32
  }
  func.func @transform_10(%arg0: i32) -> (i32, i32) {
    %c0_i32 = arith.constant 0 : i32
    %c0_i32_0 = arith.constant 0 : i32
    %c0_i32_1 = arith.constant 0 : i32
    return %c0_i32, %c0_i32_0 : i32, i32
  }
  func.func @transform_11(%arg0: i32) -> (i32, i32) {
    %c0_i32 = arith.constant 0 : i32
    %c0_i32_0 = arith.constant 0 : i32
    return %arg0, %c0_i32 : i32, i32
  }
}

</mosaic_0001>

<llo_original>
// kernel: tpu_custom_call.1
$region0: #{tpu_custom_call.1}
  #allocation0 [shape = 'u32[]', space=smem, size = 0x4, offset = 0x4, fixed_abs, tag = 'smem constant byte address 0x4 - core index']
  #allocation1 [shape = 'u32[144,128]{1,0:T(1,128)}', space=vmem, size = 0x12000, scoped, tag = 'internal scratch']
  %s0 = inlined_call_operand.hbm [shape: f32[8,343], index: 0, kind: input, shape index: {}]
  %s1 = inlined_call_operand.hbm [shape: f32[343,256], index: 1, kind: input, shape index: {}]
  %s2 = inlined_call_operand.vmem [shape: f32[1,256], index: 2, kind: input, shape index: {}]
  %s3 = inlined_call_operand.hbm [shape: f32[256,128], index: 3, kind: input, shape index: {}]
  %s4 = inlined_call_operand.vmem [shape: f32[1,128], index: 4, kind: input, shape index: {}]
  %s5 = inlined_call_operand.hbm [shape: f32[128,128], index: 5, kind: input, shape index: {}]
  %s6 = inlined_call_operand.vmem [shape: f32[1,128], index: 6, kind: input, shape index: {}]
  %s7 = inlined_call_operand.hbm [shape: f32[128,128], index: 7, kind: input, shape index: {}]
  %s8 = inlined_call_operand.vmem [shape: f32[1,128], index: 8, kind: input, shape index: {}]
  %s9 = inlined_call_operand.hbm [shape: f32[128,128], index: 9, kind: input, shape index: {}]
  %s10 = inlined_call_operand.vmem [shape: f32[1,128], index: 10, kind: input, shape index: {}]
  %s11 = inlined_call_operand.hbm [shape: f32[8,128], index: 11, kind: output, shape index: {}]
  %s12 = sld [smem:[#allocation0]]
  $region78: #{tpu_custom_call.1} parent=0
    _
  %s14 = ssub.s32 1, %s12
  %s15 = scalar_select 0, %s14, %s12
  $region1: #{tpu_custom_call.1} parent=0
    #allocation2 [shape = 'u8[12288]{0}', space=vmem, size = 0x3000, scoped, tag = 'input window, operand 0, single buffered']
    #allocation3 [shape = 's32[1]{0}', space=sflag, size = 0x4, scoped, tag = 'scoped memory for tpu_custom_call.1']
    #allocation4 [shape = 's32[1]{0}', space=sflag, size = 0x4, scoped, tag = 'scoped memory for tpu_custom_call.1']
    #allocation5 [shape = 'u8[352256]{0}', space=vmem, size = 0x56000, scoped, tag = 'input window, operand 1, single buffered']
    #allocation6 [shape = 's32[1]{0}', space=sflag, size = 0x4, scoped, tag = 'scoped memory for tpu_custom_call.1']
    #allocation7 [shape = 'u8[131072]{0}', space=vmem, size = 0x20000, scoped, tag = 'input window, operand 3, single buffered']
    #allocation8 [shape = 'u8[65536]{0}', space=vmem, size = 0x10000, scoped, tag = 'input window, operand 5, single buffered']
    #allocation9 [shape = 's32[1]{0}', space=sflag, size = 0x4, scoped, tag = 'scoped memory for tpu_custom_call.1']
    #allocation10 [shape = 'u8[65536]{0}', space=vmem, size = 0x10000, scoped, tag = 'input window, operand 7, single buffered']
    #allocation11 [shape = 'u8[65536]{0}', space=vmem, size = 0x10000, scoped, tag = 'input window, operand 9, single buffered']
    #allocation12 [shape = 's32[1]{0}', space=sflag, size = 0x4, scoped, tag = 'scoped memory for tpu_custom_call.1']
    #allocation13 [shape = 'u8[4096]{0}', space=vmem, size = 0x1000, scoped, tag = 'output window, operand 0, single buffered']
    %16 = vsyncpa [#allocation3], 0
    %17 = vsyncpa [#allocation6], 0
    %18 = vsyncpa [#allocation9], 0
    %19 = vsyncpa [#allocation12], 0
    %20 = vsyncpa [#allocation4], 0
    // Predicated region
    $region2: #{tpu_custom_call.1} parent=1 // pred_check
      _
    $region3: #{tpu_custom_call.1} parent=1 // pred_check_branch
      %22 = sbr.rel (0) target = $region5
    $region4: #{tpu_custom_call.1} parent=1 // pred_region
      %s24 = ssub.s32 384, 384
      %25 = vsyncadd [#allocation3], %s24
      %s27 = sshll.u32 [#allocation2], 4
      %s28 = int_to_ptr.vmem [resolvable:$true] %s27
      %30 = dma.hbm_to_vmem [thread:$0]  %s0, 384, %s28, [#allocation3]
    $region5: #{tpu_custom_call.1} parent=1 // pred_fallthru
      _
    // Predicated region
    $region6: #{tpu_custom_call.1} parent=1 // pred_check
      _
    $region7: #{tpu_custom_call.1} parent=1 // pred_check_branch
      %32 = sbr.rel (0) target = $region9
    $region8: #{tpu_custom_call.1} parent=1 // pred_region
      %s34 = ssub.s32 11008, 11008
      %35 = vsyncadd [#allocation6], %s34
      %s36 = sshll.u32 [#allocation5], 4
      %s37 = int_to_ptr.vmem [resolvable:$true] %s36
      %42 = dma.hbm_to_vmem [thread:$0]  %s1, 11008, %s37, [#allocation6], 256, 256, 16
    $region9: #{tpu_custom_call.1} parent=1 // pred_fallthru
      _
    // Predicated region
    $region10: #{tpu_custom_call.1} parent=1 // pred_check
      _
    $region11: #{tpu_custom_call.1} parent=1 // pred_check_branch
      %44 = sbr.rel (0) target = $region13
    $region12: #{tpu_custom_call.1} parent=1 // pred_region
      _
    $region13: #{tpu_custom_call.1} parent=1 // pred_fallthru
      _
    // Predicated region
    $region14: #{tpu_custom_call.1} parent=1 // pred_check
      _
    $region15: #{tpu_custom_call.1} parent=1 // pred_check_branch
      %46 = sbr.rel (0) target = $region17
    $region16: #{tpu_custom_call.1} parent=1 // pred_region
      %s48 = ssub.s32 4096, 4096
      %49 = vsyncadd [#allocation6], %s48
      %s50 = sshll.u32 [#allocation7], 4
      %s51 = int_to_ptr.vmem [resolvable:$true] %s50
      %56 = dma.hbm_to_vmem [thread:$0]  %s3, 4096, %s51, [#allocation6], 128, 128, 8
    $region17: #{tpu_custom_call.1} parent=1 // pred_fallthru
      _
    // Predicated region
    $region18: #{tpu_custom_call.1} parent=1 // pred_check
      _
    $region19: #{tpu_custom_call.1} parent=1 // pred_check_branch
      %58 = sbr.rel (0) target = $region21
    $region20: #{tpu_custom_call.1} parent=1 // pred_region
      _
    $region21: #{tpu_custom_call.1} parent=1 // pred_fallthru
      _
    // Predicated region
    $region22: #{tpu_custom_call.1} parent=1 // pred_check
      _
    $region23: #{tpu_custom_call.1} parent=1 // pred_check_branch
      %60 = sbr.rel (0) target = $region25
    $region24: #{tpu_custom_call.1} parent=1 // pred_region
      %s62 = ssub.s32 2048, 2048
      %63 = vsyncadd [#allocation9], %s62
      %s64 = sshll.u32 [#allocation8], 4
      %s65 = int_to_ptr.vmem [resolvable:$true] %s64
      %70 = dma.hbm_to_vmem [thread:$0]  %s5, 2048, %s65, [#allocation9], 128, 128, 8
    $region25: #{tpu_custom_call.1} parent=1 // pred_fallthru
      _
    // Predicated region
    $region26: #{tpu_custom_call.1} parent=1 // pred_check
      _
    $region27: #{tpu_custom_call.1} parent=1 // pred_check_branch
      %72 = sbr.rel (0) target = $region29
    $region28: #{tpu_custom_call.1} parent=1 // pred_region
      _
    $region29: #{tpu_custom_call.1} parent=1 // pred_fallthru
      _
    // Predicated region
    $region30: #{tpu_custom_call.1} parent=1 // pred_check
      _
    $region31: #{tpu_custom_call.1} parent=1 // pred_check_branch
      %74 = sbr.rel (0) target = $region33
    $region32: #{tpu_custom_call.1} parent=1 // pred_region
      %s76 = ssub.s32 2048, 2048
      %77 = vsyncadd [#allocation9], %s76
      %s78 = sshll.u32 [#allocation10], 4
      %s79 = int_to_ptr.vmem [resolvable:$true] %s78
      %84 = dma.hbm_to_vmem [thread:$0]  %s7, 2048, %s79, [#allocation9], 128, 128, 8
    $region33: #{tpu_custom_call.1} parent=1 // pred_fallthru
      _
    // Predicated region
    $region34: #{tpu_custom_call.1} parent=1 // pred_check
      _
    $region35: #{tpu_custom_call.1} parent=1 // pred_check_branch
      %86 = sbr.rel (0) target = $region37
    $region36: #{tpu_custom_call.1} parent=1 // pred_region
      _
    $region37: #{tpu_custom_call.1} parent=1 // pred_fallthru
      _
    // Predicated region
    $region38: #{tpu_custom_call.1} parent=1 // pred_check
      _
    $region39: #{tpu_custom_call.1} parent=1 // pred_check_branch
      %88 = sbr.rel (0) target = $region41
    $region40: #{tpu_custom_call.1} parent=1 // pred_region
      %s90 = ssub.s32 2048, 2048
      %91 = vsyncadd [#allocation12], %s90
      %s92 = sshll.u32 [#allocation11], 4
      %s93 = int_to_ptr.vmem [resolvable:$true] %s92
      %98 = dma.hbm_to_vmem [thread:$0]  %s9, 2048, %s93, [#allocation12], 128, 128, 8
    $region41: #{tpu_custom_call.1} parent=1 // pred_fallthru
      _
    // Predicated region
    $region42: #{tpu_custom_call.1} parent=1 // pred_check
      _
    $region43: #{tpu_custom_call.1} parent=1 // pred_check_branch
      %100 = sbr.rel (0) target = $region45
    $region44: #{tpu_custom_call.1} parent=1 // pred_region
      _
    $region45: #{tpu_custom_call.1} parent=1 // pred_fallthru
      _
    // Predicated region
    $region46: #{tpu_custom_call.1} parent=1 // pred_check
      _
    $region47: #{tpu_custom_call.1} parent=1 // pred_check_branch
      %102 = sbr.rel (0) target = $region49
    $region48: #{tpu_custom_call.1} parent=1 // pred_region
      %103 = dma.done [#allocation3], 384
    $region49: #{tpu_custom_call.1} parent=1 // pred_fallthru
      _
    // Predicated region
    $region50: #{tpu_custom_call.1} parent=1 // pred_check
      _
    $region51: #{tpu_custom_call.1} parent=1 // pred_check_branch
      %105 = sbr.rel (0) target = $region53
    $region52: #{tpu_custom_call.1} parent=1 // pred_region
      %106 = dma.done [#allocation6], 11008
    $region53: #{tpu_custom_call.1} parent=1 // pred_fallthru
      _
    // Predicated region
    $region54: #{tpu_custom_call.1} parent=1 // pred_check
      _
    $region55: #{tpu_custom_call.1} parent=1 // pred_check_branch
      %108 = sbr.rel (0) target = $region57
    $region56: #{tpu_custom_call.1} parent=1 // pred_region
      %109 = dma.done [#allocation6], 4096
    $region57: #{tpu_custom_call.1} parent=1 // pred_fallthru
      _
    // Predicated region
    $region58: #{tpu_custom_call.1} parent=1 // pred_check
      _
    $region59: #{tpu_custom_call.1} parent=1 // pred_check_branch
      %111 = sbr.rel (0) target = $region61
    $region60: #{tpu_custom_call.1} parent=1 // pred_region
      %112 = dma.done [#allocation9], 2048
    $region61: #{tpu_custom_call.1} parent=1 // pred_fallthru
      _
    // Predicated region
    $region62: #{tpu_custom_call.1} parent=1 // pred_check
      _
    $region63: #{tpu_custom_call.1} parent=1 // pred_check_branch
      %114 = sbr.rel (0) target = $region65
    $region64: #{tpu_custom_call.1} parent=1 // pred_region
      %115 = dma.done [#allocation9], 2048
    $region65: #{tpu_custom_call.1} parent=1 // pred_fallthru
      _
    // Predicated region
    $region66: #{tpu_custom_call.1} parent=1 // pred_check
      _
    $region67: #{tpu_custom_call.1} parent=1 // pred_check_branch
      %117 = sbr.rel (0) target = $region69
    $region68: #{tpu_custom_call.1} parent=1 // pred_region
      %118 = dma.done [#allocation12], 2048
    $region69: #{tpu_custom_call.1} parent=1 // pred_fallthru
      _
    %v119 = vld [vmem:[#allocation2] sm:$0xff]
    %v120 = vld [vmem:[#allocation2 + $0x8] sm:$0xff]
    %v121 = vld [vmem:[#allocation2 + $0x10] sm:$0xff]
    %v122 = vld [vmem:[#allocation5] sm:$0xff]
    %v123 = vld [vmem:[#allocation5 + $0x8] sm:$0xff]
    %v124 = vld [vmem:[#allocation5 + $0x10] sm:$0xff]
    %v125 = vld [vmem:[#allocation5 + $0x18] sm:$0xff]
    %v126 = vld [vmem:[#allocation5 + $0x20] sm:$0xff]
    %v127 = vld [vmem:[#allocation5 + $0x28] sm:$0xff]
    %v128 = vld [vmem:[#allocation5 + $0x30] sm:$0xff]
    %v129 = vld [vmem:[#allocation5 + $0x38] sm:$0xff]
    %v130 = vld [vmem:[#allocation5 + $0x40] sm:$0xff]
    %v131 = vld [vmem:[#allocation5 + $0x48] sm:$0xff]
    %v132 = vld [vmem:[#allocation5 + $0x50] sm:$0xff]
    %v133 = vld [vmem:[#allocation5 + $0x58] sm:$0xff]
    %v134 = vld [vmem:[#allocation5 + $0x60] sm:$0xff]
    %v135 = vld [vmem:[#allocation5 + $0x68] sm:$0xff]
    %v136 = vld [vmem:[#allocation5 + $0x70] sm:$0xff]
    %v137 = vld [vmem:[#allocation5 + $0x78] sm:$0xff]
    %v138 = vld [vmem:[#allocation5 + $0x80] sm:$0xff]
    %v139 = vld [vmem:[#allocation5 + $0x88] sm:$0xff]
    %v140 = vld [vmem:[#allocation5 + $0x90] sm:$0xff]
    %v141 = vld [vmem:[#allocation5 + $0x98] sm:$0xff]
    %v142 = vld [vmem:[#allocation5 + $0xa0] sm:$0xff]
    %v143 = vld [vmem:[#allocation5 + $0xa8] sm:$0xff]
    %v144 = vld [vmem:[#allocation5 + $0xb0] sm:$0xff]
    %v145 = vld [vmem:[#allocation5 + $0xb8] sm:$0xff]
    %v146 = vld [vmem:[#allocation5 + $0xc0] sm:$0xff]
    %v147 = vld [vmem:[#allocation5 + $0xc8] sm:$0xff]
    %v148 = vld [vmem:[#allocation5 + $0xd0] sm:$0xff]
    %v149 = vld [vmem:[#allocation5 + $0xd8] sm:$0xff]
    %v150 = vld [vmem:[#allocation5 + $0xe0] sm:$0xff]
    %v151 = vld [vmem:[#allocation5 + $0xe8] sm:$0xff]
    %v152 = vld [vmem:[#allocation5 + $0xf0] sm:$0xff]
    %v153 = vld [vmem:[#allocation5 + $0xf8] sm:$0xff]
    %v154 = vld [vmem:[#allocation5 + $0x100] sm:$0xff]
    %v155 = vld [vmem:[#allocation5 + $0x108] sm:$0xff]
    %v156 = vld [vmem:[#allocation5 + $0x110] sm:$0xff]
    %v157 = vld [vmem:[#allocation5 + $0x118] sm:$0xff]
    %v158 = vld [vmem:[#allocation5 + $0x120] sm:$0xff]
    %v159 = vld [vmem:[#allocation5 + $0x128] sm:$0xff]
    %v160 = vld [vmem:[#allocation5 + $0x130] sm:$0xff]
    %v161 = vld [vmem:[#allocation5 + $0x138] sm:$0xff]
    %v162 = vld [vmem:[#allocation5 + $0x140] sm:$0xff]
    %v163 = vld [vmem:[#allocation5 + $0x148] sm:$0xff]
    %v164 = vld [vmem:[#allocation5 + $0x150] sm:$0xff]
    %v165 = vld [vmem:[#allocation5 + $0x158] sm:$0xff]
    %v166 = vld [vmem:[#allocation5 + $0x160] sm:$0xff]
    %v167 = vld [vmem:[#allocation5 + $0x168] sm:$0xff]
    %v168 = vld [vmem:[#allocation5 + $0x170] sm:$0xff]
    %v169 = vld [vmem:[#allocation5 + $0x178] sm:$0xff]
    %v170 = vld [vmem:[#allocation5 + $0x180] sm:$0xff]
    %v171 = vld [vmem:[#allocation5 + $0x188] sm:$0xff]
    %v172 = vld [vmem:[#allocation5 + $0x190] sm:$0xff]
    %v173 = vld [vmem:[#allocation5 + $0x198] sm:$0xff]
    %v174 = vld [vmem:[#allocation5 + $0x1a0] sm:$0xff]
    %v175 = vld [vmem:[#allocation5 + $0x1a8] sm:$0xff]
    %v176 = vld [vmem:[#allocation5 + $0x1b0] sm:$0xff]
    %v177 = vld [vmem:[#allocation5 + $0x1b8] sm:$0xff]
    %v178 = vld [vmem:[#allocation5 + $0x1c0] sm:$0xff]
    %v179 = vld [vmem:[#allocation5 + $0x1c8] sm:$0xff]
    %v180 = vld [vmem:[#allocation5 + $0x1d0] sm:$0xff]
    %v181 = vld [vmem:[#allocation5 + $0x1d8] sm:$0xff]
    %v182 = vld [vmem:[#allocation5 + $0x1e0] sm:$0xff]
    %v183 = vld [vmem:[#allocation5 + $0x1e8] sm:$0xff]
    %v184 = vld [vmem:[#allocation5 + $0x1f0] sm:$0xff]
    %v185 = vld [vmem:[#allocation5 + $0x1f8] sm:$0xff]
    %v186 = vld [vmem:[#allocation5 + $0x200] sm:$0xff]
    %v187 = vld [vmem:[#allocation5 + $0x208] sm:$0xff]
    %v188 = vld [vmem:[#allocation5 + $0x210] sm:$0xff]
    %v189 = vld [vmem:[#allocation5 + $0x218] sm:$0xff]
    %v190 = vld [vmem:[#allocation5 + $0x220] sm:$0xff]
    %v191 = vld [vmem:[#allocation5 + $0x228] sm:$0xff]
    %v192 = vld [vmem:[#allocation5 + $0x230] sm:$0xff]
    %v193 = vld [vmem:[#allocation5 + $0x238] sm:$0xff]
    %v194 = vld [vmem:[#allocation5 + $0x240] sm:$0xff]
    %v195 = vld [vmem:[#allocation5 + $0x248] sm:$0xff]
    %v196 = vld [vmem:[#allocation5 + $0x250] sm:$0xff]
    %v197 = vld [vmem:[#allocation5 + $0x258] sm:$0xff]
    %v198 = vld [vmem:[#allocation5 + $0x260] sm:$0xff]
    %v199 = vld [vmem:[#allocation5 + $0x268] sm:$0xff]
    %v200 = vld [vmem:[#allocation5 + $0x270] sm:$0xff]
    %v201 = vld [vmem:[#allocation5 + $0x278] sm:$0xff]
    %v202 = vld [vmem:[#allocation5 + $0x280] sm:$0xff]
    %v203 = vld [vmem:[#allocation5 + $0x288] sm:$0xff]
    %v204 = vld [vmem:[#allocation5 + $0x290] sm:$0xff]
    %v205 = vld [vmem:[#allocation5 + $0x298] sm:$0xff]
    %v206 = vld [vmem:[#allocation5 + $0x2a0] sm:$0x7f]
    %v207 = vld [vmem:[#allocation5 + $0x2a8] sm:$0x7f]
    %v208 = vld [vmem:[%s2] sm:$0x3]
    %v210 = vlaneseq
    %v211 = vshrl.u32 %v210, 7
    %v212 = vsub.s32 0, %v211
    %v213 = vrot.slane %v208, %v212
    %v214 = vlaneseq
    %v215 = vshrl.u32 %v214, 7
    %v216 = vsub.s32 1, %v215
    %v217 = vrot.slane %v208, %v216
    %vm220 = vcmask 711680
    %v222 = vsel %vm220, %v121, 0
    %vm224 = vcmask 1046528
    %v226 = vsel %vm224, %v206, 0
    %v229 = vsel %vm224, %v207, 0
    %231 = vmatprep.subr.mxu0 %v123
    %232 = vmatpush1.msra.mxu0 %v122
    %233 = vmatprep.subr.mxu0 %v125
    %234 = vmatpush1.msra.mxu0 %v124
    %235 = vmatprep.subr.mxu0 %v127
    %236 = vmatpush1.msra.mxu0 %v126
    %237 = vmatprep.subr.mxu0 %v129
    %238 = vmatpush1.msra.mxu0 %v128
    %239 = vmatprep.subr.mxu0 %v131
    %240 = vmatpush1.msra.mxu0 %v130
    %241 = vmatprep.subr.mxu0 %v133
    %242 = vmatpush1.msra.mxu0 %v132
    %243 = vmatprep.subr.mxu0 %v135
    %244 = vmatpush1.msra.mxu0 %v134
    %245 = vmatprep.subr.mxu0 %v137
    %246 = vmatpush1.msra.mxu0 %v136
    %247 = vmatprep.subr.mxu0 %v139
    %248 = vmatpush1.msra.mxu0 %v138
    %249 = vmatprep.subr.mxu0 %v141
    %250 = vmatpush1.msra.mxu0 %v140
    %251 = vmatprep.subr.mxu0 %v143
    %252 = vmatpush1.msra.mxu0 %v142
    %253 = vmatprep.subr.mxu0 %v145
    %254 = vmatpush1.msra.mxu0 %v144
    %255 = vmatprep.subr.mxu0 %v147
    %256 = vmatpush1.msra.mxu0 %v146
    %257 = vmatprep.subr.mxu0 %v149
    %258 = vmatpush1.msra.mxu0 %v148
    %259 = vmatprep.subr.mxu0 %v151
    %260 = vmatpush1.msra.mxu0 %v150
    %261 = vmatprep.subr.mxu0 %v153
    %262 = vmatpush1.msra.mxu0 %v152
    %263 = vmatprep.subr.mxu0 %v155
    %264 = vmatpush1.msra.mxu0 %v154
    %265 = vmatprep.subr.mxu0 %v157
    %266 = vmatpush1.msra.mxu0 %v156
    %267 = vmatprep.subr.mxu0 %v159
    %268 = vmatpush1.msra.mxu0 %v158
    %269 = vmatprep.subr.mxu0 %v161
    %270 = vmatpush1.msra.mxu0 %v160
    %271 = vmatprep.subr.mxu0 %v163
    %272 = vmatpush1.msra.mxu0 %v162
    %273 = vmatprep.subr.mxu0 %v165
    %274 = vmatpush1.msra.mxu0 %v164
    %275 = vmatprep.subr.mxu0 %v167
    %276 = vmatpush1.msra.mxu0 %v166
    %277 = vmatprep.subr.mxu0 %v169
    %278 = vmatpush1.msra.mxu0 %v168
    %279 = vmatprep.subr.mxu0 %v171
    %280 = vmatpush1.msra.mxu0 %v170
    %281 = vmatprep.subr.mxu0 %v173
    %282 = vmatpush1.msra.mxu0 %v172
    %283 = vmatprep.subr.mxu0 %v175
    %284 = vmatpush1.msra.mxu0 %v174
    %285 = vmatprep.subr.mxu0 %v177
    %286 = vmatpush1.msra.mxu0 %v176
    %287 = vmatprep.subr.mxu0 %v179
    %288 = vmatpush1.msra.mxu0 %v178
    %289 = vmatprep.subr.mxu0 %v181
    %290 = vmatpush1.msra.mxu0 %v180
    %291 = vmatprep.subr.mxu0 %v183
    %292 = vmatpush1.msra.mxu0 %v182
    %293 = vmatprep.subr.mxu0 %v185
    %294 = vmatpush1.msra.mxu0 %v184
    %295 = vmatprep.mubr.f32.mxu0 %v120
    %296 = vmatmul.mubr.f32.gmra.mrb[0].mxu0 %v119
    %v297 = vpop.f32.mrb[0].mxu0
    %v298 = vadd.f32 %v213, %v297
    %v299 = vpop.f32.mrb[0].mxu0
    %v300 = vadd.f32 %v217, %v299
    %301 = vdwg.mxu0
    %302 = vmatprep.subr.mxu0 %v187
    %303 = vmatpush1.msra.mxu0 %v186
    %304 = vmatprep.subr.mxu0 %v189
    %305 = vmatpush1.msra.mxu0 %v188
    %306 = vmatprep.subr.mxu0 %v191
    %307 = vmatpush1.msra.mxu0 %v190
    %308 = vmatprep.subr.mxu0 %v193
    %309 = vmatpush1.msra.mxu0 %v192
    %310 = vmatprep.subr.mxu0 %v195
    %311 = vmatpush1.msra.mxu0 %v194
    %312 = vmatprep.subr.mxu0 %v197
    %313 = vmatpush1.msra.mxu0 %v196
    %314 = vmatprep.subr.mxu0 %v199
    %315 = vmatpush1.msra.mxu0 %v198
    %316 = vmatprep.subr.mxu0 %v201
    %317 = vmatpush1.msra.mxu0 %v200
    %318 = vmatprep.subr.mxu0 %v203
    %319 = vmatpush1.msra.mxu0 %v202
    %320 = vmatprep.subr.mxu0 %v205
    %321 = vmatpush1.msra.mxu0 %v204
    %322 = vmatprep.subr.mxu0 %v229
    %323 = vmatpush1.msra.mxu0 %v226
    %324 = vmatprep.subr.mxu0 0.0
    %325 = vmatpush1.msra.mxu0 0.0
    %326 = vmatprep.subr.mxu0 0.0
    %327 = vmatpush1.msra.mxu0 0.0
    %328 = vmatprep.subr.mxu0 0.0
    %329 = vmatpush1.msra.mxu0 0.0
    %330 = vmatprep.subr.mxu0 0.0
    %331 = vmatpush1.msra.mxu0 0.0
    %332 = vmatprep.subr.mxu0 0.0
    %333 = vmatpush1.msra.mxu0 0.0
    %334 = vmatprep.subr.mxu0 0.0
    %335 = vmatpush1.msra.mxu0 0.0
    %336 = vmatprep.subr.mxu0 0.0
    %337 = vmatpush1.msra.mxu0 0.0
    %338 = vmatprep.subr.mxu0 0.0
    %339 = vmatpush1.msra.mxu0 0.0
    %340 = vmatprep.subr.mxu0 0.0
    %341 = vmatpush1.msra.mxu0 0.0
    %342 = vmatprep.subr.mxu0 0.0
    %343 = vmatpush1.msra.mxu0 0.0
    %344 = vmatprep.subr.mxu0 0.0
    %345 = vmatpush1.msra.mxu0 0.0
    %346 = vmatprep.subr.mxu0 0.0
    %347 = vmatpush1.msra.mxu0 0.0
    %348 = vmatprep.subr.mxu0 0.0
    %349 = vmatpush1.msra.mxu0 0.0
    %350 = vmatprep.subr.mxu0 0.0
    %351 = vmatpush1.msra.mxu0 0.0
    %352 = vmatprep.subr.mxu0 0.0
    %353 = vmatpush1.msra.mxu0 0.0
    %354 = vmatprep.subr.mxu0 0.0
    %355 = vmatpush1.msra.mxu0 0.0
    %356 = vmatprep.subr.mxu0 0.0
    %357 = vmatpush1.msra.mxu0 0.0
    %358 = vmatprep.subr.mxu0 0.0
    %359 = vmatpush1.msra.mxu0 0.0
    %360 = vmatprep.subr.mxu0 0.0
    %361 = vmatpush1.msra.mxu0 0.0
    %362 = vmatprep.subr.mxu0 0.0
    %363 = vmatpush1.msra.mxu0 0.0
    %364 = vmatprep.subr.mxu0 0.0
    %365 = vmatpush1.msra.mxu0 0.0
    %366 = vmatprep.mubr.f32.mxu0 0.0
    %367 = vmatmul.mubr.f32.gmra.mrb[0].mxu0 %v222
    %v368 = vpop.f32.mrb[0].mxu0
    %v369 = vadd.f32 %v298, %v368
    %v370 = vpop.f32.mrb[0].mxu0
    %v371 = vadd.f32 %v300, %v370
    %372 = vdwg.mxu0
    %v373 = vmax.f32 %v369, 0.0
    %v374 = vmax.f32 %v371, 0.0
    %v375 = vld [vmem:[#allocation7] sm:$0xff]
    %v376 = vld [vmem:[#allocation7 + $0x8] sm:$0xff]
    %v377 = vld [vmem:[#allocation7 + $0x10] sm:$0xff]
    %v378 = vld [vmem:[#allocation7 + $0x18] sm:$0xff]
    %v379 = vld [vmem:[#allocation7 + $0x20] sm:$0xff]
    %v380 = vld [vmem:[#allocation7 + $0x28] sm:$0xff]
    %v381 = vld [vmem:[#allocation7 + $0x30] sm:$0xff]
    %v382 = vld [vmem:[#allocation7 + $0x38] sm:$0xff]
    %v383 = vld [vmem:[#allocation7 + $0x40] sm:$0xff]
    %v384 = vld [vmem:[#allocation7 + $0x48] sm:$0xff]
    %v385 = vld [vmem:[#allocation7 + $0x50] sm:$0xff]
    %v386 = vld [vmem:[#allocation7 + $0x58] sm:$0xff]
    %v387 = vld [vmem:[#allocation7 + $0x60] sm:$0xff]
    %v388 = vld [vmem:[#allocation7 + $0x68] sm:$0xff]
    %v389 = vld [vmem:[#allocation7 + $0x70] sm:$0xff]
    %v390 = vld [vmem:[#allocation7 + $0x78] sm:$0xff]
    %v391 = vld [vmem:[#allocation7 + $0x80] sm:$0xff]
    %v392 = vld [vmem:[#allocation7 + $0x88] sm:$0xff]
    %v393 = vld [vmem:[#allocation7 + $0x90] sm:$0xff]
    %v394 = vld [vmem:[#allocation7 + $0x98] sm:$0xff]
    %v395 = vld [vmem:[#allocation7 + $0xa0] sm:$0xff]
    %v396 = vld [vmem:[#allocation7 + $0xa8] sm:$0xff]
    %v397 = vld [vmem:[#allocation7 + $0xb0] sm:$0xff]
    %v398 = vld [vmem:[#allocation7 + $0xb8] sm:$0xff]
    %v399 = vld [vmem:[#allocation7 + $0xc0] sm:$0xff]
    %v400 = vld [vmem:[#allocation7 + $0xc8] sm:$0xff]
    %v401 = vld [vmem:[#allocation7 + $0xd0] sm:$0xff]
    %v402 = vld [vmem:[#allocation7 + $0xd8] sm:$0xff]
    %v403 = vld [vmem:[#allocation7 + $0xe0] sm:$0xff]
    %v404 = vld [vmem:[#allocation7 + $0xe8] sm:$0xff]
    %v405 = vld [vmem:[#allocation7 + $0xf0] sm:$0xff]
    %v406 = vld [vmem:[#allocation7 + $0xf8] sm:$0xff]
    %v407 = vld [vmem:[%s4] sm:$0x1]
    %v409 = vlaneseq
    %v410 = vshrl.u32 %v409, 7
    %v411 = vsub.s32 0, %v410
    %v412 = vrot.slane %v407, %v411
    %414 = vmatprep.subr.mxu0 0.0
    %415 = vmatpush1.msra.mxu0 %v375
    %416 = vmatprep.subr.mxu0 0.0
    %417 = vmatpush1.msra.mxu0 %v376
    %418 = vmatprep.subr.mxu0 0.0
    %419 = vmatpush1.msra.mxu0 %v377
    %420 = vmatprep.subr.mxu0 0.0
    %421 = vmatpush1.msra.mxu0 %v378
    %422 = vmatprep.subr.mxu0 0.0
    %423 = vmatpush1.msra.mxu0 %v379
    %424 = vmatprep.subr.mxu0 0.0
    %425 = vmatpush1.msra.mxu0 %v380
    %426 = vmatprep.subr.mxu0 0.0
    %427 = vmatpush1.msra.mxu0 %v381
    %428 = vmatprep.subr.mxu0 0.0
    %429 = vmatpush1.msra.mxu0 %v382
    %430 = vmatprep.subr.mxu0 0.0
    %431 = vmatpush1.msra.mxu0 %v383
    %432 = vmatprep.subr.mxu0 0.0
    %433 = vmatpush1.msra.mxu0 %v384
    %434 = vmatprep.subr.mxu0 0.0
    %435 = vmatpush1.msra.mxu0 %v385
    %436 = vmatprep.subr.mxu0 0.0
    %437 = vmatpush1.msra.mxu0 %v386
    %438 = vmatprep.subr.mxu0 0.0
    %439 = vmatpush1.msra.mxu0 %v387
    %440 = vmatprep.subr.mxu0 0.0
    %441 = vmatpush1.msra.mxu0 %v388
    %442 = vmatprep.subr.mxu0 0.0
    %443 = vmatpush1.msra.mxu0 %v389
    %444 = vmatprep.subr.mxu0 0.0
    %445 = vmatpush1.msra.mxu0 %v390
    %446 = vmatprep.subr.mxu0 0.0
    %447 = vmatpush1.msra.mxu0 %v391
    %448 = vmatprep.subr.mxu0 0.0
    %449 = vmatpush1.msra.mxu0 %v392
    %450 = vmatprep.subr.mxu0 0.0
    %451 = vmatpush1.msra.mxu0 %v393
    %452 = vmatprep.subr.mxu0 0.0
    %453 = vmatpush1.msra.mxu0 %v394
    %454 = vmatprep.subr.mxu0 0.0
    %455 = vmatpush1.msra.mxu0 %v395
    %456 = vmatprep.subr.mxu0 0.0
    %457 = vmatpush1.msra.mxu0 %v396
    %458 = vmatprep.subr.mxu0 0.0
    %459 = vmatpush1.msra.mxu0 %v397
    %460 = vmatprep.subr.mxu0 0.0
    %461 = vmatpush1.msra.mxu0 %v398
    %462 = vmatprep.subr.mxu0 0.0
    %463 = vmatpush1.msra.mxu0 %v399
    %464 = vmatprep.subr.mxu0 0.0
    %465 = vmatpush1.msra.mxu0 %v400
    %466 = vmatprep.subr.mxu0 0.0
    %467 = vmatpush1.msra.mxu0 %v401
    %468 = vmatprep.subr.mxu0 0.0
    %469 = vmatpush1.msra.mxu0 %v402
    %470 = vmatprep.subr.mxu0 0.0
    %471 = vmatpush1.msra.mxu0 %v403
    %472 = vmatprep.subr.mxu0 0.0
    %473 = vmatpush1.msra.mxu0 %v404
    %474 = vmatprep.subr.mxu0 0.0
    %475 = vmatpush1.msra.mxu0 %v405
    %476 = vmatprep.subr.mxu0 0.0
    %477 = vmatpush1.msra.mxu0 %v406
    %478 = vmatprep.mubr.f32.mxu0 %v374
    %479 = vmatmul.mubr.f32.gmra.mrb[0].mxu0 %v373
    %v480 = vpop.f32.mrb[0].mxu0
    %v481 = vadd.f32 %v412, %v480
    %v482 = vpop.f32.mrb[0].mxu0
    %483 = vdwg.mxu0
    %v484 = vmax.f32 %v481, 0.0
    %v485 = vld [vmem:[#allocation8] sm:$0xff]
    %v486 = vld [vmem:[#allocation8 + $0x8] sm:$0xff]
    %v487 = vld [vmem:[#allocation8 + $0x10] sm:$0xff]
    %v488 = vld [vmem:[#allocation8 + $0x18] sm:$0xff]
    %v489 = vld [vmem:[#allocation8 + $0x20] sm:$0xff]
    %v490 = vld [vmem:[#allocation8 + $0x28] sm:$0xff]
    %v491 = vld [vmem:[#allocation8 + $0x30] sm:$0xff]
    %v492 = vld [vmem:[#allocation8 + $0x38] sm:$0xff]
    %v493 = vld [vmem:[#allocation8 + $0x40] sm:$0xff]
    %v494 = vld [vmem:[#allocation8 + $0x48] sm:$0xff]
    %v495 = vld [vmem:[#allocation8 + $0x50] sm:$0xff]
    %v496 = vld [vmem:[#allocation8 + $0x58] sm:$0xff]
    %v497 = vld [vmem:[#allocation8 + $0x60] sm:$0xff]
    %v498 = vld [vmem:[#allocation8 + $0x68] sm:$0xff]
    %v499 = vld [vmem:[#allocation8 + $0x70] sm:$0xff]
    %v500 = vld [vmem:[#allocation8 + $0x78] sm:$0xff]
    %v501 = vld [vmem:[%s6] sm:$0x1]
    %v503 = vlaneseq
    %v504 = vshrl.u32 %v503, 7
    %v505 = vsub.s32 0, %v504
    %v506 = vrot.slane %v501, %v505
    %508 = vmatprep.subr.mxu0 0.0
    %509 = vmatpush1.msra.mxu0 %v485
    %510 = vmatprep.subr.mxu0 0.0
    %511 = vmatpush1.msra.mxu0 %v486
    %512 = vmatprep.subr.mxu0 0.0
    %513 = vmatpush1.msra.mxu0 %v487
    %514 = vmatprep.subr.mxu0 0.0
    %515 = vmatpush1.msra.mxu0 %v488
    %516 = vmatprep.subr.mxu0 0.0
    %517 = vmatpush1.msra.mxu0 %v489
    %518 = vmatprep.subr.mxu0 0.0
    %519 = vmatpush1.msra.mxu0 %v490
    %520 = vmatprep.subr.mxu0 0.0
    %521 = vmatpush1.msra.mxu0 %v491
    %522 = vmatprep.subr.mxu0 0.0
    %523 = vmatpush1.msra.mxu0 %v492
    %524 = vmatprep.subr.mxu0 0.0
    %525 = vmatpush1.msra.mxu0 %v493
    %526 = vmatprep.subr.mxu0 0.0
    %527 = vmatpush1.msra.mxu0 %v494
    %528 = vmatprep.subr.mxu0 0.0
    %529 = vmatpush1.msra.mxu0 %v495
    %530 = vmatprep.subr.mxu0 0.0
    %531 = vmatpush1.msra.mxu0 %v496
    %532 = vmatprep.subr.mxu0 0.0
    %533 = vmatpush1.msra.mxu0 %v497
    %534 = vmatprep.subr.mxu0 0.0
    %535 = vmatpush1.msra.mxu0 %v498
    %536 = vmatprep.subr.mxu0 0.0
    %537 = vmatpush1.msra.mxu0 %v499
    %538 = vmatprep.subr.mxu0 0.0
    %539 = vmatpush1.msra.mxu0 %v500
    %540 = vmatprep.subr.mxu0 0.0
    %541 = vmatpush1.msra.mxu0 0.0
    %542 = vmatprep.subr.mxu0 0.0
    %543 = vmatpush1.msra.mxu0 0.0
    %544 = vmatprep.subr.mxu0 0.0
    %545 = vmatpush1.msra.mxu0 0.0
    %546 = vmatprep.subr.mxu0 0.0
    %547 = vmatpush1.msra.mxu0 0.0
    %548 = vmatprep.subr.mxu0 0.0
    %549 = vmatpush1.msra.mxu0 0.0
    %550 = vmatprep.subr.mxu0 0.0
    %551 = vmatpush1.msra.mxu0 0.0
    %552 = vmatprep.subr.mxu0 0.0
    %553 = vmatpush1.msra.mxu0 0.0
    %554 = vmatprep.subr.mxu0 0.0
    %555 = vmatpush1.msra.mxu0 0.0
    %556 = vmatprep.subr.mxu0 0.0
    %557 = vmatpush1.msra.mxu0 0.0
    %558 = vmatprep.subr.mxu0 0.0
    %559 = vmatpush1.msra.mxu0 0.0
    %560 = vmatprep.subr.mxu0 0.0
    %561 = vmatpush1.msra.mxu0 0.0
    %562 = vmatprep.subr.mxu0 0.0
    %563 = vmatpush1.msra.mxu0 0.0
    %564 = vmatprep.subr.mxu0 0.0
    %565 = vmatpush1.msra.mxu0 0.0
    %566 = vmatprep.subr.mxu0 0.0
    %567 = vmatpush1.msra.mxu0 0.0
    %568 = vmatprep.subr.mxu0 0.0
    %569 = vmatpush1.msra.mxu0 0.0
    %570 = vmatprep.subr.mxu0 0.0
    %571 = vmatpush1.msra.mxu0 0.0
    %572 = vmatprep.mubr.f32.mxu0 0.0
    %573 = vmatmul.mubr.f32.gmra.mrb[0].mxu0 %v484
    %v574 = vpop.f32.mrb[0].mxu0
    %v575 = vadd.f32 %v506, %v574
    %v576 = vpop.f32.mrb[0].mxu0
    %577 = vdwg.mxu0
    %v578 = vmax.f32 %v575, 0.0
    %v579 = vld [vmem:[#allocation10] sm:$0xff]
    %v580 = vld [vmem:[#allocation10 + $0x8] sm:$0xff]
    %v581 = vld [vmem:[#allocation10 + $0x10] sm:$0xff]
    %v582 = vld [vmem:[#allocation10 + $0x18] sm:$0xff]
    %v583 = vld [vmem:[#allocation10 + $0x20] sm:$0xff]
    %v584 = vld [vmem:[#allocation10 + $0x28] sm:$0xff]
    %v585 = vld [vmem:[#allocation10 + $0x30] sm:$0xff]
    %v586 = vld [vmem:[#allocation10 + $0x38] sm:$0xff]
    %v587 = vld [vmem:[#allocation10 + $0x40] sm:$0xff]
    %v588 = vld [vmem:[#allocation10 + $0x48] sm:$0xff]
    %v589 = vld [vmem:[#allocation10 + $0x50] sm:$0xff]
    %v590 = vld [vmem:[#allocation10 + $0x58] sm:$0xff]
    %v591 = vld [vmem:[#allocation10 + $0x60] sm:$0xff]
    %v592 = vld [vmem:[#allocation10 + $0x68] sm:$0xff]
    %v593 = vld [vmem:[#allocation10 + $0x70] sm:$0xff]
    %v594 = vld [vmem:[#allocation10 + $0x78] sm:$0xff]
    %v595 = vld [vmem:[%s8] sm:$0x1]
    %v597 = vlaneseq
    %v598 = vshrl.u32 %v597, 7
    %v599 = vsub.s32 0, %v598
    %v600 = vrot.slane %v595, %v599
    %602 = vmatprep.subr.mxu0 0.0
    %603 = vmatpush1.msra.mxu0 %v579
    %604 = vmatprep.subr.mxu0 0.0
    %605 = vmatpush1.msra.mxu0 %v580
    %606 = vmatprep.subr.mxu0 0.0
    %607 = vmatpush1.msra.mxu0 %v581
    %608 = vmatprep.subr.mxu0 0.0
    %609 = vmatpush1.msra.mxu0 %v582
    %610 = vmatprep.subr.mxu0 0.0
    %611 = vmatpush1.msra.mxu0 %v583
    %612 = vmatprep.subr.mxu0 0.0
    %613 = vmatpush1.msra.mxu0 %v584
    %614 = vmatprep.subr.mxu0 0.0
    %615 = vmatpush1.msra.mxu0 %v585
    %616 = vmatprep.subr.mxu0 0.0
    %617 = vmatpush1.msra.mxu0 %v586
    %618 = vmatprep.subr.mxu0 0.0
    %619 = vmatpush1.msra.mxu0 %v587
    %620 = vmatprep.subr.mxu0 0.0
    %621 = vmatpush1.msra.mxu0 %v588
    %622 = vmatprep.subr.mxu0 0.0
    %623 = vmatpush1.msra.mxu0 %v589
    %624 = vmatprep.subr.mxu0 0.0
    %625 = vmatpush1.msra.mxu0 %v590
    %626 = vmatprep.subr.mxu0 0.0
    %627 = vmatpush1.msra.mxu0 %v591
    %628 = vmatprep.subr.mxu0 0.0
    %629 = vmatpush1.msra.mxu0 %v592
    %630 = vmatprep.subr.mxu0 0.0
    %631 = vmatpush1.msra.mxu0 %v593
    %632 = vmatprep.subr.mxu0 0.0
    %633 = vmatpush1.msra.mxu0 %v594
    %634 = vmatprep.subr.mxu0 0.0
    %635 = vmatpush1.msra.mxu0 0.0
    %636 = vmatprep.subr.mxu0 0.0
    %637 = vmatpush1.msra.mxu0 0.0
    %638 = vmatprep.subr.mxu0 0.0
    %639 = vmatpush1.msra.mxu0 0.0
    %640 = vmatprep.subr.mxu0 0.0
    %641 = vmatpush1.msra.mxu0 0.0
    %642 = vmatprep.subr.mxu0 0.0
    %643 = vmatpush1.msra.mxu0 0.0
    %644 = vmatprep.subr.mxu0 0.0
    %645 = vmatpush1.msra.mxu0 0.0
    %646 = vmatprep.subr.mxu0 0.0
    %647 = vmatpush1.msra.mxu0 0.0
    %648 = vmatprep.subr.mxu0 0.0
    %649 = vmatpush1.msra.mxu0 0.0
    %650 = vmatprep.subr.mxu0 0.0
    %651 = vmatpush1.msra.mxu0 0.0
    %652 = vmatprep.subr.mxu0 0.0
    %653 = vmatpush1.msra.mxu0 0.0
    %654 = vmatprep.subr.mxu0 0.0
    %655 = vmatpush1.msra.mxu0 0.0
    %656 = vmatprep.subr.mxu0 0.0
    %657 = vmatpush1.msra.mxu0 0.0
    %658 = vmatprep.subr.mxu0 0.0
    %659 = vmatpush1.msra.mxu0 0.0
    %660 = vmatprep.subr.mxu0 0.0
    %661 = vmatpush1.msra.mxu0 0.0
    %662 = vmatprep.subr.mxu0 0.0
    %663 = vmatpush1.msra.mxu0 0.0
    %664 = vmatprep.subr.mxu0 0.0
    %665 = vmatpush1.msra.mxu0 0.0
    %666 = vmatprep.mubr.f32.mxu0 0.0
    %667 = vmatmul.mubr.f32.gmra.mrb[0].mxu0 %v578
    %v668 = vpop.f32.mrb[0].mxu0
    %v669 = vadd.f32 %v600, %v668
    %v670 = vpop.f32.mrb[0].mxu0
    %671 = vdwg.mxu0
    %v672 = vmax.f32 %v669, 0.0
    %v673 = vld [vmem:[#allocation11] sm:$0xff]
    %v674 = vld [vmem:[#allocation11 + $0x8] sm:$0xff]
    %v675 = vld [vmem:[#allocation11 + $0x10] sm:$0xff]
    %v676 = vld [vmem:[#allocation11 + $0x18] sm:$0xff]
    %v677 = vld [vmem:[#allocation11 + $0x20] sm:$0xff]
    %v678 = vld [vmem:[#allocation11 + $0x28] sm:$0xff]
    %v679 = vld [vmem:[#allocation11 + $0x30] sm:$0xff]
    %v680 = vld [vmem:[#allocation11 + $0x38] sm:$0xff]
    %v681 = vld [vmem:[#allocation11 + $0x40] sm:$0xff]
    %v682 = vld [vmem:[#allocation11 + $0x48] sm:$0xff]
    %v683 = vld [vmem:[#allocation11 + $0x50] sm:$0xff]
    %v684 = vld [vmem:[#allocation11 + $0x58] sm:$0xff]
    %v685 = vld [vmem:[#allocation11 + $0x60] sm:$0xff]
    %v686 = vld [vmem:[#allocation11 + $0x68] sm:$0xff]
    %v687 = vld [vmem:[#allocation11 + $0x70] sm:$0xff]
    %v688 = vld [vmem:[#allocation11 + $0x78] sm:$0xff]
    %v689 = vld [vmem:[%s10] sm:$0x1]
    %v691 = vlaneseq
    %v692 = vshrl.u32 %v691, 7
    %v693 = vsub.s32 0, %v692
    %v694 = vrot.slane %v689, %v693
    %696 = vmatprep.subr.mxu0 0.0
    %697 = vmatpush1.msra.mxu0 %v673
    %698 = vmatprep.subr.mxu0 0.0
    %699 = vmatpush1.msra.mxu0 %v674
    %700 = vmatprep.subr.mxu0 0.0
    %701 = vmatpush1.msra.mxu0 %v675
    %702 = vmatprep.subr.mxu0 0.0
    %703 = vmatpush1.msra.mxu0 %v676
    %704 = vmatprep.subr.mxu0 0.0
    %705 = vmatpush1.msra.mxu0 %v677
    %706 = vmatprep.subr.mxu0 0.0
    %707 = vmatpush1.msra.mxu0 %v678
    %708 = vmatprep.subr.mxu0 0.0
    %709 = vmatpush1.msra.mxu0 %v679
    %710 = vmatprep.subr.mxu0 0.0
    %711 = vmatpush1.msra.mxu0 %v680
    %712 = vmatprep.subr.mxu0 0.0
    %713 = vmatpush1.msra.mxu0 %v681
    %714 = vmatprep.subr.mxu0 0.0
    %715 = vmatpush1.msra.mxu0 %v682
    %716 = vmatprep.subr.mxu0 0.0
    %717 = vmatpush1.msra.mxu0 %v683
    %718 = vmatprep.subr.mxu0 0.0
    %719 = vmatpush1.msra.mxu0 %v684
    %720 = vmatprep.subr.mxu0 0.0
    %721 = vmatpush1.msra.mxu0 %v685
    %722 = vmatprep.subr.mxu0 0.0
    %723 = vmatpush1.msra.mxu0 %v686
    %724 = vmatprep.subr.mxu0 0.0
    %725 = vmatpush1.msra.mxu0 %v687
    %726 = vmatprep.subr.mxu0 0.0
    %727 = vmatpush1.msra.mxu0 %v688
    %728 = vmatprep.subr.mxu0 0.0
    %729 = vmatpush1.msra.mxu0 0.0
    %730 = vmatprep.subr.mxu0 0.0
    %731 = vmatpush1.msra.mxu0 0.0
    %732 = vmatprep.subr.mxu0 0.0
    %733 = vmatpush1.msra.mxu0 0.0
    %734 = vmatprep.subr.mxu0 0.0
    %735 = vmatpush1.msra.mxu0 0.0
    %736 = vmatprep.subr.mxu0 0.0
    %737 = vmatpush1.msra.mxu0 0.0
    %738 = vmatprep.subr.mxu0 0.0
    %739 = vmatpush1.msra.mxu0 0.0
    %740 = vmatprep.subr.mxu0 0.0
    %741 = vmatpush1.msra.mxu0 0.0
    %742 = vmatprep.subr.mxu0 0.0
    %743 = vmatpush1.msra.mxu0 0.0
    %744 = vmatprep.subr.mxu0 0.0
    %745 = vmatpush1.msra.mxu0 0.0
    %746 = vmatprep.subr.mxu0 0.0
    %747 = vmatpush1.msra.mxu0 0.0
    %748 = vmatprep.subr.mxu0 0.0
    %749 = vmatpush1.msra.mxu0 0.0
    %750 = vmatprep.subr.mxu0 0.0
    %751 = vmatpush1.msra.mxu0 0.0
    %752 = vmatprep.subr.mxu0 0.0
    %753 = vmatpush1.msra.mxu0 0.0
    %754 = vmatprep.subr.mxu0 0.0
    %755 = vmatpush1.msra.mxu0 0.0
    %756 = vmatprep.subr.mxu0 0.0
    %757 = vmatpush1.msra.mxu0 0.0
    %758 = vmatprep.subr.mxu0 0.0
    %759 = vmatpush1.msra.mxu0 0.0
    %760 = vmatprep.mubr.f32.mxu0 0.0
    %761 = vmatmul.mubr.f32.gmra.mrb[0].mxu0 %v672
    %v762 = vpop.f32.mrb[0].mxu0
    %v763 = vadd.f32 %v694, %v762
    %v764 = vpop.f32.mrb[0].mxu0
    %765 = vdwg.mxu0
    %766 = vmax.xlane.f32.xlu0 %v763
    %v767 = vpop.xlane.xlu0 %766
    %v768 = vsub.f32 %v763, %v767
    %v769 = vmul.f32 %v768, 1.442695
    %v770 = vpow.pop %v769
    %771 = vadd.xlane.f32.xlu0 %v770
    %v772 = vpop.xlane.xlu0 %771
    %v773 = vrcp.pop %v772
    %v774 = vmul.f32 %v770, %v773
    %775 = vst [vmem:[#allocation13] sm:$0xff] %v774
    // Predicated region
    $region70: #{tpu_custom_call.1} parent=1 // pred_check
      _
    $region71: #{tpu_custom_call.1} parent=1 // pred_check_branch
      %777 = sbr.rel (0) target = $region73
    $region72: #{tpu_custom_call.1} parent=1 // pred_region
      %s779 = ssub.s32 128, 128
      %780 = vsyncadd [#allocation4], %s779
      %s782 = sshll.u32 [#allocation13], 4
      %s783 = int_to_ptr.vmem [resolvable:$true] %s782
      %785 = dma.vmem_to_hbm [thread:$0]  %s783, 128, %s11, [#allocation4]
    $region73: #{tpu_custom_call.1} parent=1 // pred_fallthru
      _
    // Predicated region
    $region74: #{tpu_custom_call.1} parent=1 // pred_check
      _
    $region75: #{tpu_custom_call.1} parent=1 // pred_check_branch
      %787 = sbr.rel (0) target = $region77
    $region76: #{tpu_custom_call.1} parent=1 // pred_region
      %788 = dma.done [#allocation4], 128
    $region77: #{tpu_custom_call.1} parent=1 // pred_fallthru
      _
    %789 = vsyncpa [#allocation3], 1
    %790 = vsyncpa [#allocation6], 1
    %791 = vsyncpa [#allocation9], 1
    %792 = vsyncpa [#allocation12], 1
    %793 = vsyncpa [#allocation4], 1

</llo_original>
